<compile_context>
chip_gen: v7x
topology: tpu7x:2x2x1
jax: 0.10.0
libtpu: 0.0.40
codegen_flags: <defaults>
</compile_context>

<pallas_src>
import numpy as np
import jax
import jax.numpy as jnp
from jax.experimental import pallas as pl
from jax.experimental.pallas import tpu as pltpu


def _round_up(x, m):
    return (x + m - 1) // m * m


def _proj_kernel(x_ref, w_ref, b_ref, o_ref):
    # One tile of (packed) tokens (tm, Kp) @ resident weight (Kp, Ep) + bias.
    acc = jnp.dot(x_ref[...], w_ref[...], preferred_element_type=jnp.float32)
    o_ref[...] = (acc + b_ref[...]).astype(o_ref.dtype)


def patch_embed_proj(tokens, w_t, bias, *, tm=4096, min_grid_steps=4,
                     input_buffers=2, out_dtype=jnp.float32):
    """Row-streaming GEMM with a VMEM-resident weight.

    tokens: (Nr, Kp)  compute dtype (already lane-packed by the caller)
    w_t:    (Kp, Ep)  compute dtype (block-diagonal if packed)
    bias:   (1, Ep)   float32
    returns (Nr, Ep)  out_dtype

    `tm` is rows of `tokens` per grid step.  The cap keeps >= min_grid_steps
    steps (>= 2 per TensorCore on v7x megacore) so per-core double buffering
    still overlaps DMA with compute.
    """
    Nr, Kp = tokens.shape
    Kw, Ep = w_t.shape
    assert Kp == Kw and bias.shape == (1, Ep)

    # Sublane granularity of the streamed operand (f32: 8, bf16: 16).
    sub = 8 * (4 // jnp.dtype(tokens.dtype).itemsize)
    cap = _round_up(pl.cdiv(Nr, min_grid_steps), sub)
    tm = max(sub, min(int(tm), cap))
    if tm >= Nr:
        tm = Nr                      # single full block (== array shape: legal)
    grid = (pl.cdiv(Nr, tm),)        # ragged edge -> Pallas partial last block

    if input_buffers > 2:            # v7x knob: deeper input pipelining
        tok_spec = pl.BlockSpec((tm, Kp), lambda i: (i, 0),
                                pipeline_mode=pl.Buffered(input_buffers))
    else:
        tok_spec = pl.BlockSpec((tm, Kp), lambda i: (i, 0))

    return pl.pallas_call(
        _proj_kernel,
        out_shape=jax.ShapeDtypeStruct((Nr, Ep), out_dtype),
        grid_spec=pltpu.PrefetchScalarGridSpec(
            num_scalar_prefetch=0,
            grid=grid,
            in_specs=[
                tok_spec,                                   # streamed token tile
                pl.BlockSpec((Kp, Ep), lambda i: (0, 0)),   # resident weight
                pl.BlockSpec((1, Ep), lambda i: (0, 0)),    # resident bias
            ],
            out_specs=pl.BlockSpec((tm, Ep), lambda i: (i, 0)),
        ),
        compiler_params=pltpu.CompilerParams(
            dimension_semantics=("parallel",),
            vmem_limit_bytes=32 * 1024 * 1024,
            # Let XLA fuse simple producers (e.g. the dtype cast) into the
            # input pipeline of operand 0; see TODO(synk) in the header.
            allow_input_fusion=[True, False, False],
        ),
    )(tokens, w_t, bias)


class PatchEmbed2D:
    """JAX/Pallas port of the PyTorch PatchEmbed2D module."""

    def __init__(self, patch_size=(16, 16), in_channels=3, embed_dim=768,
                 key=None, compute_dtype=jnp.bfloat16, out_dtype=jnp.float32,
                 tm_tokens=16384):
        self.patch_size = tuple(patch_size)
        self.in_channels = in_channels
        self.embed_dim = embed_dim
        self.compute_dtype = jnp.dtype(compute_dtype)
        self.out_dtype = out_dtype
        self.tm_tokens = tm_tokens

        K = patch_size[0] * patch_size[1] * in_channels
        if key is None:
            key = jax.random.PRNGKey(0)
        # kaiming_normal_ (fan_in, gain=sqrt(2)) + zero bias, as in the module.
        std = (2.0 / K) ** 0.5
        self.weight = std * jax.random.normal(key, (embed_dim, K), jnp.float32)  # (E, K)
        self.bias = jnp.zeros((embed_dim,), jnp.float32)

        # Max lane-pack factor: bf16 -> 4 (256/128-lane GEMM, ample MXU headroom
        # on all gens); f32 -> 2 (keeps v5e's weaker f32 MXU out of the roofline).
        self.max_pack = 4 if self.compute_dtype == jnp.dtype(jnp.bfloat16) else 2

        # Pre-build resident block-diagonal weights + tiled bias for every pack
        # factor we may pick at call time (tiny: at most 256x128 f32).
        w_t = self.weight.T  # (K, E) f32 master
        self._packed = {}
        for p in (1, 2, 4):
            if p > self.max_pack:
                continue
            wp = jnp.zeros((p * K, p * embed_dim), jnp.float32)
            for a in range(p):
                wp = wp.at[a * K:(a + 1) * K,
                           a * embed_dim:(a + 1) * embed_dim].set(w_t)
            bp = jnp.tile(self.bias, p).reshape(1, p * embed_dim)
            self._packed[p] = (wp.astype(self.compute_dtype), bp)

    def _pick_pack(self, n_tokens):
        for p in (4, 2, 1):
            if p <= self.max_pack and n_tokens % p == 0:
                return p
        return 1

    def __call__(self, x, is_template=True):
        B, C, H, W = x.shape
        pH, pW = self.patch_size
        assert C == self.in_channels and H % pH == 0 and W % pW == 0
        nH, nW = H // pH, W // pW
        K = C * pH * pW
        N = B * nH * nW

        # Patchify (reshape/transpose glue); fused by XLA with the compute-dtype
        # cast so the materialized token matrix is bf16-sized by default.
        t = x.reshape(B, C, nH, pH, nW, pW)
        t = jnp.transpose(t, (0, 2, 4, 1, 3, 5))
        tokens = t.reshape(N, K).astype(self.compute_dtype)

        # Lane-dense packing: (N,K)->(N/p, p*K) and (N,E)->(N/p, p*E) are free
        # row-major views; the weight is blockdiag(W^T x p) built at __init__.
        p = self._pick_pack(N)
        wp, bp = self._packed[p]
        tok_p = tokens.reshape(N // p, p * K)

        y = patch_embed_proj(tok_p, wp, bp,
                             tm=max(1, self.tm_tokens // p),
                             out_dtype=self.out_dtype)            # (N/p, p*E)
        return y.reshape(B, nH * nW, self.embed_dim)


def _reference(x, weight, bias, patch_size):
    """float64 host reference of the PyTorch forward."""
    xn = np.asarray(x, np.float64)
    B, C, H, W = xn.shape
    pH, pW = patch_size
    nH, nW = H // pH, W // pW
    t = xn.reshape(B, C, nH, pH, nW, pW).transpose(0, 2, 4, 1, 3, 5)
    t = t.reshape(B, nH * nW, C * pH * pW)
    return t @ np.asarray(weight, np.float64).T + np.asarray(bias, np.float64)


if __name__ == "__main__":
    key = jax.random.PRNGKey(0)
    k_x, k_w, k_o, k_a, k_b, k_c = jax.random.split(key, 6)

    B, C, H, W = 2, 4, 16, 16
    patch_size = (4, 4)
    embed_dim = 32
    x = jax.random.normal(k_x, (B, C, H, W), jnp.float32)

    # 1) Default path: bf16 compute, pack-4 lane-dense GEMM, f32 output.
    model = PatchEmbed2D(patch_size=patch_size, in_channels=C,
                         embed_dim=embed_dim, key=k_w)
    out = jax.block_until_ready(jax.jit(model.__call__)(x))
    ref = _reference(x, model.weight, model.bias, patch_size)
    assert out.shape == (B, (H // 4) * (W // 4), embed_dim)
    assert np.allclose(np.asarray(out, np.float64), ref, atol=5e-2, rtol=5e-2)

    # 2) Bit-faithful f32 compute path (pack factor 2).
    model_f32 = PatchEmbed2D(patch_size=patch_size, in_channels=C,
                             embed_dim=embed_dim, key=k_w,
                             compute_dtype=jnp.float32)
    out_f32 = jax.block_until_ready(jax.jit(model_f32.__call__)(x))
    assert np.allclose(np.asarray(out_f32, np.float64), ref, atol=1e-3, rtol=1e-3)

    # 3) Pack-1 fallback: token count not divisible by 2 or 4 (N = 1*3*3 = 9).
    x_odd = jax.random.normal(k_o, (1, C, 12, 12), jnp.float32)
    out_odd = jax.block_until_ready(jax.jit(model.__call__)(x_odd))
    ref_odd = _reference(x_odd, model.weight, model.bias, patch_size)
    assert out_odd.shape == (1, 9, embed_dim)
    assert np.allclose(np.asarray(out_odd, np.float64), ref_odd,
                       atol=5e-2, rtol=5e-2)

    # 4) Ragged multi-step grid on the raw projection kernel
    #    (44 rows, tm capped to 16 -> grid of 3 with a partial last block).
    rows, Kp, Ep = 44, 128, 64
    xr = jax.random.normal(k_a, (rows, Kp), jnp.float32)
    wr = 0.1 * jax.random.normal(k_b, (Kp, Ep), jnp.float32)
    br = jax.random.normal(k_c, (1, Ep), jnp.float32)
    yr = jax.block_until_ready(
        jax.jit(lambda a, w, b: patch_embed_proj(a, w, b, tm=16))(xr, wr, br))
    ref_r = (np.asarray(xr, np.float64) @ np.asarray(wr, np.float64)
             + np.asarray(br, np.float64))
    assert np.allclose(np.asarray(yr, np.float64), ref_r, atol=1e-3, rtol=1e-3)

    print("KERNEL_OK")
</pallas_src>

<mosaic_0001>
module attributes {stable_mosaic.version = 11 : i64} {
  func.func @_proj_kernel(%arg0: i32, %arg1: memref<8x256xbf16, #tpu.memory_space<vmem>>, %arg2: memref<256x128xbf16, #tpu.memory_space<vmem>>, %arg3: memref<1x128xf32, #tpu.memory_space<vmem>>, %arg4: memref<8x128xf32, #tpu.memory_space<vmem>>) attributes {dimension_semantics = [#tpu.dimension_semantics<parallel>], iteration_bounds = array<i64: 1>, scalar_prefetch = 0 : i64, scratch_operands = 0 : i64, tpu.core_type = #tpu.core_type<tc>, window_params = [{transform_indices = @transform_0, window_bounds = array<i64: 8, 256>}, {pipeline_mode = #tpu.pipeline_mode<synchronous>, transform_indices = @transform_1, window_bounds = array<i64: 256, 128>}, {pipeline_mode = #tpu.pipeline_mode<synchronous>, transform_indices = @transform_2, window_bounds = array<i64: 1, 128>}, {transform_indices = @transform_3, window_bounds = array<i64: 8, 128>}]} {
    %c0 = arith.constant 0 : index
    %c0_0 = arith.constant 0 : index
    %0 = vector.load %arg1[%c0, %c0_0] : memref<8x256xbf16, #tpu.memory_space<vmem>>, vector<8x256xbf16>
    %c0_1 = arith.constant 0 : index
    %c0_2 = arith.constant 0 : index
    %1 = vector.load %arg2[%c0_1, %c0_2] : memref<256x128xbf16, #tpu.memory_space<vmem>>, vector<256x128xbf16>
    %cst = arith.constant dense<0.000000e+00> : vector<8x128xf32>
    %2 = tpu.matmul %0, %1, %cst {dimension_numbers = #tpu.dot_dimension_numbers<[1], [0], [0], [1], [0, 0, 1, 1], [], []>} : vector<8x256xbf16>, vector<256x128xbf16>, vector<8x128xf32> -> vector<8x128xf32>
    %c0_3 = arith.constant 0 : index
    %c0_4 = arith.constant 0 : index
    %3 = vector.load %arg3[%c0_3, %c0_4] : memref<1x128xf32, #tpu.memory_space<vmem>>, vector<1x128xf32>
    %4 = vector.broadcast %3 : vector<1x128xf32> to vector<8x128xf32>
    %5 = arith.addf %2, %4 : vector<8x128xf32>
    %c0_5 = arith.constant 0 : index
    %c0_6 = arith.constant 0 : index
    %6 = vector.load %arg4[%c0_5, %c0_6] : memref<8x128xf32, #tpu.memory_space<vmem>>, vector<8x128xf32>
    tpu.vector_store %arg4[%c0_5, %c0_6], %5 {strides = array<i32>} : memref<8x128xf32, #tpu.memory_space<vmem>>, vector<8x128xf32>,
    return
  }
  func.func @transform_0(%arg0: i32) -> (i32, i32) {
    %c0_i32 = arith.constant 0 : i32
    %c0_i32_0 = arith.constant 0 : i32
    return %arg0, %c0_i32 : i32, i32
  }
  func.func @transform_1(%arg0: i32) -> (i32, i32) {
    %c0_i32 = arith.constant 0 : i32
    %c0_i32_0 = arith.constant 0 : i32
    %c0_i32_1 = arith.constant 0 : i32
    return %c0_i32, %c0_i32_0 : i32, i32
  }
  func.func @transform_2(%arg0: i32) -> (i32, i32) {
    %c0_i32 = arith.constant 0 : i32
    %c0_i32_0 = arith.constant 0 : i32
    %c0_i32_1 = arith.constant 0 : i32
    return %c0_i32, %c0_i32_0 : i32, i32
  }
  func.func @transform_3(%arg0: i32) -> (i32, i32) {
    %c0_i32 = arith.constant 0 : i32
    %c0_i32_0 = arith.constant 0 : i32
    return %arg0, %c0_i32 : i32, i32
  }
}

</mosaic_0001>

<llo_original>
// kernel: a_call__.1
$region0: #{a_call__.1}
  #allocation0 [shape = 'u32[]', space=smem, size = 0x4, offset = 0x4, fixed_abs, tag = 'smem constant byte address 0x4 - core index']
  #allocation1 [shape = 'u32[144,128]{1,0:T(1,128)}', space=vmem, size = 0x12000, scoped, tag = 'internal scratch']
  %s0 = inlined_call_operand.vmem [shape: bf16[8,256], index: 0, kind: input, shape index: {}]
  %s1 = inlined_call_operand.vmem [shape: bf16[256,128], index: 1, kind: input, shape index: {}]
  %s2 = inlined_call_operand.vmem [shape: f32[1,128], index: 2, kind: input, shape index: {}]
  %s3 = inlined_call_operand.vmem [shape: f32[8,128], index: 3, kind: output, shape index: {}]
  %s4 = sld [smem:[#allocation0]]
  $region22: #{a_call__.1} parent=0
    _
  %s6 = ssub.s32 1, %s4
  %s7 = scalar_select 0, %s6, %s4
  // Predicated region
  $region2: #{a_call__.1} parent=0 // pred_check
    _
  $region3: #{a_call__.1} parent=0 // pred_check_branch
    %9 = sbr.rel (0) target = $region5
  $region4: #{a_call__.1} parent=0 // pred_region
    _
  $region5: #{a_call__.1} parent=0 // pred_fallthru
    _
  // Predicated region
  $region6: #{a_call__.1} parent=0 // pred_check
    _
  $region7: #{a_call__.1} parent=0 // pred_check_branch
    %11 = sbr.rel (0) target = $region9
  $region8: #{a_call__.1} parent=0 // pred_region
    _
  $region9: #{a_call__.1} parent=0 // pred_fallthru
    _
  // Predicated region
  $region10: #{a_call__.1} parent=0 // pred_check
    _
  $region11: #{a_call__.1} parent=0 // pred_check_branch
    %13 = sbr.rel (0) target = $region13
  $region12: #{a_call__.1} parent=0 // pred_region
    _
  $region13: #{a_call__.1} parent=0 // pred_fallthru
    _
  %v15 = vld [vmem:[%s0] sm:$0xff]
  %v16 = vld [vmem:[%s1] sm:$0xf]
  %v17 = vld [vmem:[%s1 + $0x4] sm:$0xf]
  %v18 = vld [vmem:[%s1 + $0x8] sm:$0xf]
  %v19 = vld [vmem:[%s1 + $0xc] sm:$0xf]
  %v20 = vld [vmem:[%s1 + $0x10] sm:$0xf]
  %v21 = vld [vmem:[%s1 + $0x14] sm:$0xf]
  %v22 = vld [vmem:[%s1 + $0x18] sm:$0xf]
  %v23 = vld [vmem:[%s1 + $0x1c] sm:$0xf]
  %v24 = vld [vmem:[%s1 + $0x20] sm:$0xf]
  %v25 = vld [vmem:[%s1 + $0x24] sm:$0xf]
  %v26 = vld [vmem:[%s1 + $0x28] sm:$0xf]
  %v27 = vld [vmem:[%s1 + $0x2c] sm:$0xf]
  %v28 = vld [vmem:[%s1 + $0x30] sm:$0xf]
  %v29 = vld [vmem:[%s1 + $0x34] sm:$0xf]
  %v30 = vld [vmem:[%s1 + $0x38] sm:$0xf]
  %v31 = vld [vmem:[%s1 + $0x3c] sm:$0xf]
  %v32 = vld [vmem:[%s1 + $0x40] sm:$0xf]
  %v33 = vld [vmem:[%s1 + $0x44] sm:$0xf]
  %v34 = vld [vmem:[%s1 + $0x48] sm:$0xf]
  %v35 = vld [vmem:[%s1 + $0x4c] sm:$0xf]
  %v36 = vld [vmem:[%s1 + $0x50] sm:$0xf]
  %v37 = vld [vmem:[%s1 + $0x54] sm:$0xf]
  %v38 = vld [vmem:[%s1 + $0x58] sm:$0xf]
  %v39 = vld [vmem:[%s1 + $0x5c] sm:$0xf]
  %v40 = vld [vmem:[%s1 + $0x60] sm:$0xf]
  %v41 = vld [vmem:[%s1 + $0x64] sm:$0xf]
  %v42 = vld [vmem:[%s1 + $0x68] sm:$0xf]
  %v43 = vld [vmem:[%s1 + $0x6c] sm:$0xf]
  %v44 = vld [vmem:[%s1 + $0x70] sm:$0xf]
  %v45 = vld [vmem:[%s1 + $0x74] sm:$0xf]
  %v46 = vld [vmem:[%s1 + $0x78] sm:$0xf]
  %v47 = vld [vmem:[%s1 + $0x7c] sm:$0xf]
  %v48 = vld [vmem:[%s2] sm:$0x1]
  %v50 = vlaneseq
  %v51 = vshrl.u32 %v50, 7
  %v52 = vsub.s32 0, %v51
  %v53 = vrot.slane %v48, %v52
  %v56 = vunpack.c.l.b16 %v15
  %v57 = vunpack.c.h.b16 %v15
  %v58 = vpack.c.b16 %v56, %v56
  %v59 = vpack.c.b16 %v57, %v57
  %v94 = vunpack.c.l.b16 %v16
  %v95 = vunpack.c.l.b16 %v17
  %v96 = vunpack.c.l.b16 %v18
  %v97 = vunpack.c.l.b16 %v19
  %v98 = vunpack.c.l.b16 %v20
  %v99 = vunpack.c.l.b16 %v21
  %v100 = vunpack.c.l.b16 %v22
  %v101 = vunpack.c.l.b16 %v23
  %v102 = vunpack.c.l.b16 %v24
  %v103 = vunpack.c.l.b16 %v25
  %v104 = vunpack.c.l.b16 %v26
  %v105 = vunpack.c.l.b16 %v27
  %v106 = vunpack.c.l.b16 %v28
  %v107 = vunpack.c.l.b16 %v29
  %v108 = vunpack.c.l.b16 %v30
  %v109 = vunpack.c.l.b16 %v31
  %v110 = vunpack.c.l.b16 %v32
  %v111 = vunpack.c.l.b16 %v33
  %v112 = vunpack.c.l.b16 %v34
  %v113 = vunpack.c.l.b16 %v35
  %v114 = vunpack.c.l.b16 %v36
  %v115 = vunpack.c.l.b16 %v37
  %v116 = vunpack.c.l.b16 %v38
  %v117 = vunpack.c.l.b16 %v39
  %v118 = vunpack.c.l.b16 %v40
  %v119 = vunpack.c.l.b16 %v41
  %v120 = vunpack.c.l.b16 %v42
  %v121 = vunpack.c.l.b16 %v43
  %v122 = vunpack.c.l.b16 %v44
  %v123 = vunpack.c.l.b16 %v45
  %v124 = vunpack.c.l.b16 %v46
  %v125 = vunpack.c.l.b16 %v47
  %v126 = vpack.c.b16 %v95, %v94
  %v127 = vpack.c.b16 %v97, %v96
  %v128 = vpack.c.b16 %v99, %v98
  %v129 = vpack.c.b16 %v101, %v100
  %v130 = vpack.c.b16 %v103, %v102
  %v131 = vpack.c.b16 %v105, %v104
  %v132 = vpack.c.b16 %v107, %v106
  %v133 = vpack.c.b16 %v109, %v108
  %v134 = vpack.c.b16 %v111, %v110
  %v135 = vpack.c.b16 %v113, %v112
  %v136 = vpack.c.b16 %v115, %v114
  %v137 = vpack.c.b16 %v117, %v116
  %v138 = vpack.c.b16 %v119, %v118
  %v139 = vpack.c.b16 %v121, %v120
  %v140 = vpack.c.b16 %v123, %v122
  %v141 = vpack.c.b16 %v125, %v124
  %158 = vmatprep.subr.bf16.mxu0 0
  %159 = vmatpush1.bf16.msra.mxu0 %v126
  %160 = vmatprep.subr.bf16.mxu0 0
  %161 = vmatpush1.bf16.msra.mxu0 %v127
  %162 = vmatprep.subr.bf16.mxu0 0
  %163 = vmatpush1.bf16.msra.mxu0 %v128
  %164 = vmatprep.subr.bf16.mxu0 0
  %165 = vmatpush1.bf16.msra.mxu0 %v129
  %166 = vmatprep.subr.bf16.mxu0 0
  %167 = vmatpush1.bf16.msra.mxu0 %v130
  %168 = vmatprep.subr.bf16.mxu0 0
  %169 = vmatpush1.bf16.msra.mxu0 %v131
  %170 = vmatprep.subr.bf16.mxu0 0
  %171 = vmatpush1.bf16.msra.mxu0 %v132
  %172 = vmatprep.subr.bf16.mxu0 0
  %173 = vmatpush1.bf16.msra.mxu0 %v133
  %174 = vmatprep.subr.bf16.mxu0 0
  %175 = vmatpush1.bf16.msra.mxu0 %v134
  %176 = vmatprep.subr.bf16.mxu0 0
  %177 = vmatpush1.bf16.msra.mxu0 %v135
  %178 = vmatprep.subr.bf16.mxu0 0
  %179 = vmatpush1.bf16.msra.mxu0 %v136
  %180 = vmatprep.subr.bf16.mxu0 0
  %181 = vmatpush1.bf16.msra.mxu0 %v137
  %182 = vmatprep.subr.bf16.mxu0 0
  %183 = vmatpush1.bf16.msra.mxu0 %v138
  %184 = vmatprep.subr.bf16.mxu0 0
  %185 = vmatpush1.bf16.msra.mxu0 %v139
  %186 = vmatprep.subr.bf16.mxu0 0
  %187 = vmatpush1.bf16.msra.mxu0 %v140
  %188 = vmatprep.subr.bf16.mxu0 0
  %189 = vmatpush1.bf16.msra.mxu0 %v141
  %190 = vmatprep.mubr.bf16.mxu0 %v59
  %191 = vmatmul.mubr.bf16.gmra.mrb[0].mxu0 %v58
  %v192 = vpop.f32.mrb[0].mxu0
  %v193 = vadd.f32 %v53, %v192
  %v194 = vpop.f32.mrb[0].mxu0
  %v195 = vpop.f32.mrb[0].mxu0
  %v196 = vpop.f32.mrb[0].mxu0
  %197 = vdwg.mxu0
  %198 = vst [vmem:[%s3] sm:$0xff] %v193
  // Predicated region
  $region14: #{a_call__.1} parent=0 // pred_check
    _
  $region15: #{a_call__.1} parent=0 // pred_check_branch
    %200 = sbr.rel (0) target = $region17
  $region16: #{a_call__.1} parent=0 // pred_region
    _
  $region17: #{a_call__.1} parent=0 // pred_fallthru
    _
  // Predicated region
  $region18: #{a_call__.1} parent=0 // pred_check
    _
  $region19: #{a_call__.1} parent=0 // pred_check_branch
    %202 = sbr.rel (0) target = $region21
  $region20: #{a_call__.1} parent=0 // pred_region
    _
  $region21: #{a_call__.1} parent=0 // pred_fallthru
    _

</llo_original>
